<compile_context>
chip_gen: v6e
topology: v6e:2x2x1
jax: 0.10.0
libtpu: 0.0.40
codegen_flags: <defaults>
</compile_context>

<pallas_src>
import functools

import jax
import jax.numpy as jnp
from jax import lax
from jax.experimental import pallas as pl
from jax.experimental.pallas import tpu as pltpu


# ------------------------------------------------------------------ kernel ---
def convblock_kernel(slab_ref, w_ref, g_ref, b_ref, o_ref, *,
                     taps, pw, wo, ho, p, lc, eps, stack_taps):
    # slab_ref: (1, C2, Lp) bf16
    # w_ref:    (Ct, taps*taps*C2) bf16  when stack_taps
    #           (taps, taps, Ct, C2) bf16 otherwise
    # g_ref/b_ref: (Ct, 1) f32
    # o_ref: (1, Ct, Lc) bf16
    ct = o_ref.shape[1]

    if stack_taps:
        # Single MXU dot with K = taps*taps*C2: fills the systolic depth even
        # for small-C2 layers and touches the f32 accumulator only once.
        windows = []
        for a in range(taps):
            for b in range(taps):
                off = a * pw + b
                windows.append(slab_ref[0, :, pl.ds(off, lc)])     # (C2, Lc)
        rhs = jnp.concatenate(windows, axis=0)                     # (K, Lc)
        acc = jnp.dot(w_ref[...], rhs, preferred_element_type=jnp.float32)
    else:
        acc = jnp.zeros((ct, lc), jnp.float32)
        for a in range(taps):
            for b in range(taps):
                off = a * pw + b
                rhs = slab_ref[0, :, pl.ds(off, lc)]               # (C2, Lc)
                acc = acc + jnp.dot(w_ref[a, b], rhs,
                                    preferred_element_type=jnp.float32)

    # InstanceNorm2d stats over the P valid spatial positions.  Mask generated
    # in-kernel (no lane-padded mask operand, no MXU matvec); halo / padding
    # columns contribute zero.
    col = lax.broadcasted_iota(jnp.int32, (1, lc), 1)
    valid = jnp.logical_and(col % pw < wo, col < ho * pw)
    maskf = valid.astype(jnp.float32)                              # (1, Lc)
    inv_p = 1.0 / p
    acc_m = acc * maskf
    mean = jnp.sum(acc_m, axis=-1, keepdims=True) * inv_p          # (Ct, 1)
    msq = jnp.sum(acc_m * acc, axis=-1, keepdims=True) * inv_p     # (Ct, 1)
    var = jnp.maximum(msq - mean * mean, 0.0)                      # biased var

    # Fused affine (one FMA pass over the (Ct, Lc) tile) + LeakyReLU(0.2).
    scale = g_ref[...] * lax.rsqrt(var + eps)
    shift = b_ref[...] - mean * scale
    y = acc * scale + shift
    o_ref[0] = jnp.where(y >= 0.0, y, 0.2 * y).astype(o_ref.dtype)


# ----------------------------------------------------------------- wrapper ---
def _round_up(x, m):
    return (x + m - 1) // m * m


def conv_block(x, weight, gamma, beta, *, stride, eps=1e-5):
    """x: (N, C_in, H, W) f32.  weight: (C_out, C_in, 4, 4).  Returns NCHW bf16."""
    N, C_in, H, W = x.shape
    C_out = weight.shape[0]
    k = 4
    s = stride
    if k % s != 0:
        # TODO(synk): general strides (4 % stride != 0) need ragged phase
        # slabs; the pix2pix discriminator only uses stride 1 and 2.
        raise NotImplementedError("conv_block supports stride in {1, 2, 4}")
    t = k // s                        # taps per spatial dim after phase split

    # Reflect padding (padding=1), matching padding_mode='reflect'.
    x_pad = jnp.pad(x, ((0, 0), (0, 0), (1, 1), (1, 1)), mode="reflect")
    Hp, Wp = H + 2, W + 2
    Ho = (Hp - k) // s + 1
    Wo = (Wp - k) // s + 1
    P = Ho * Wo
    Ph = Ho + t - 1
    Pw = Wo + t - 1
    C2 = s * s * C_in

    # Phase (space-to-depth): removes the stride with plain XLA slices and no
    # data duplication.  c2 = (rh*s + rw)*C_in + ci.
    phases = []
    for rh in range(s):
        for rw in range(s):
            phases.append(x_pad[:, :, rh:rh + s * Ph:s, rw:rw + s * Pw:s])
    xph = phases[0] if s == 1 else jnp.concatenate(phases, axis=1)  # (N,C2,Ph,Pw)

    # Flatten spatial; zero-pad so every in-kernel tap window stays in bounds.
    Lc = _round_up(Ho * Pw, 128)                  # lane-dense compute width
    Lp = _round_up(Lc + (t - 1) * Pw + (t - 1), 128)
    slab = xph.reshape(N, C2, Ph * Pw)
    slab = jnp.pad(slab, ((0, 0), (0, 0), (0, Lp - Ph * Pw)))
    slab = slab.astype(jnp.bfloat16)

    # C_out tiling: second "parallel" grid axis; guarantee >= 2 parallel steps
    # where possible (v7x has 2 TensorCores).  128 keeps the v7x 64 MiB VMEM
    # budget; v5e/v6e could use 256 for the deep layers.
    Ct = 128 if C_out % 128 == 0 else C_out
    n_ct = C_out // Ct
    if N * n_ct < 2 and Ct % 2 == 0 and (Ct // 2) % 8 == 0:
        Ct //= 2
        n_ct = C_out // Ct

    # Small-C2 layers: stack the t*t taps into one K = t*t*C2 contraction.
    stack_taps = C2 < 128

    # Weight layouts matching the phase/channel ordering.
    w6 = weight.reshape(C_out, C_in, t, s, t, s)      # (co, ci, a, rh, b, rw)
    if stack_taps:
        # Flat K ordering (a, b, c2), c2 = (rh*s+rw)*C_in + ci, matching the
        # in-kernel window stacking order.
        wr = w6.transpose(0, 2, 4, 3, 5, 1).reshape(C_out, t * t * C2)
        w_block = (Ct, t * t * C2)
        w_index = lambda c: (c, 0)
    else:
        wr = w6.transpose(2, 4, 0, 3, 5, 1).reshape(t, t, C_out, C2)
        w_block = (t, t, Ct, C2)
        w_index = lambda c: (0, 0, c, 0)
    wr = wr.astype(jnp.bfloat16)

    gamma2 = gamma.reshape(C_out, 1).astype(jnp.float32)
    beta2 = beta.reshape(C_out, 1).astype(jnp.float32)

    # Grid order: keep the larger of {per-sample slab, per-tile weight block}
    # constant along the inner grid axis so it is DMA'd once, not N*n_ct times.
    slab_bytes = C2 * Lp * 2
    w_bytes = t * t * Ct * C2 * 2
    channels_outer = w_bytes > slab_bytes

    if channels_outer:
        grid = (n_ct, N)
        slab_spec = pl.BlockSpec((1, C2, Lp), lambda c, n: (n, 0, 0))
        w_spec = pl.BlockSpec(w_block, lambda c, n: w_index(c))
        gb_spec = pl.BlockSpec((Ct, 1), lambda c, n: (c, 0))
        out_spec = pl.BlockSpec((1, Ct, Lc), lambda c, n: (n, c, 0))
    else:
        grid = (N, n_ct)
        slab_spec = pl.BlockSpec((1, C2, Lp), lambda n, c: (n, 0, 0))
        w_spec = pl.BlockSpec(w_block, lambda n, c: w_index(c))
        gb_spec = pl.BlockSpec((Ct, 1), lambda n, c: (c, 0))
        out_spec = pl.BlockSpec((1, Ct, Lc), lambda n, c: (n, c, 0))

    out = pl.pallas_call(
        functools.partial(convblock_kernel, taps=t, pw=Pw, wo=Wo, ho=Ho,
                          p=P, lc=Lc, eps=eps, stack_taps=stack_taps),
        out_shape=jax.ShapeDtypeStruct((N, C_out, Lc), jnp.bfloat16),
        grid_spec=pltpu.PrefetchScalarGridSpec(
            num_scalar_prefetch=0,
            grid=grid,
            in_specs=[slab_spec, w_spec, gb_spec, gb_spec],
            out_specs=out_spec,
        ),
        compiler_params=pltpu.CompilerParams(
            dimension_semantics=("parallel", "parallel"),
            vmem_limit_bytes=48 * 1024 * 1024,
        ),
    )(slab, wr, gamma2, beta2)

    # (N, C_out, Lc) -> NCHW: drop halo / padding columns; no transpose needed.
    y = out[:, :, :Ho * Pw].reshape(N, C_out, Ho, Pw)[:, :, :, :Wo]
    return y


# --------------------------------------------------------------- reference ---
def conv_block_ref(x, weight, gamma, beta, *, stride, eps=1e-5):
    x_pad = jnp.pad(x, ((0, 0), (0, 0), (1, 1), (1, 1)), mode="reflect")
    y = lax.conv_general_dilated(
        x_pad, weight, window_strides=(stride, stride), padding="VALID",
        dimension_numbers=("NCHW", "OIHW", "NCHW"),
    )
    mean = jnp.mean(y, axis=(2, 3), keepdims=True)
    var = jnp.mean(jnp.square(y - mean), axis=(2, 3), keepdims=True)
    y = (y - mean) * lax.rsqrt(var + eps)
    y = y * gamma.reshape(1, -1, 1, 1) + beta.reshape(1, -1, 1, 1)
    return jnp.where(y >= 0, y, 0.2 * y)


# -------------------------------------------------------------------- main ---
if __name__ == "__main__":
    def run_case(N, C_in, H, W, C_out, stride, key):
        kx, kw, kg, kb = jax.random.split(key, 4)
        x = jax.random.normal(kx, (N, C_in, H, W), dtype=jnp.float32)
        fan_in = C_in * 4 * 4
        weight = jax.random.normal(kw, (C_out, C_in, 4, 4),
                                   dtype=jnp.float32) / jnp.sqrt(fan_in)
        gamma = 1.0 + 0.1 * jax.random.normal(kg, (C_out,), dtype=jnp.float32)
        beta = 0.1 * jax.random.normal(kb, (C_out,), dtype=jnp.float32)

        out = conv_block(x, weight, gamma, beta, stride=stride)
        out = jax.block_until_ready(out)
        ref = conv_block_ref(x, weight, gamma, beta, stride=stride)

        Ho = (H + 2 - 4) // stride + 1
        Wo = (W + 2 - 4) // stride + 1
        assert out.shape == (N, C_out, Ho, Wo), out.shape
        out_f32 = out.astype(jnp.float32)
        err = float(jnp.max(jnp.abs(out_f32 - ref)))
        # bf16 MXU operands + bf16 output -> looser tolerance than f32 ref.
        assert jnp.allclose(out_f32, ref, atol=5e-2, rtol=5e-2), err

    key = jax.random.PRNGKey(0)
    k1, k2 = jax.random.split(key)
    # Stacked-taps path (C2 = 16 < 128), stride-2 conv.
    run_case(N=2, C_in=4, H=16, W=16, C_out=8, stride=2, key=k1)
    # Per-tap loop path (C2 = 128), stride-2 conv.
    run_case(N=2, C_in=32, H=8, W=8, C_out=16, stride=2, key=k2)

    print("KERNEL_OK")
</pallas_src>

<mosaic_0001>
module attributes {stable_mosaic.version = 11 : i64} {
  func.func @convblock_kernel(%arg0: i32, %arg1: i32, %arg2: memref<1x16x256xbf16, #tpu.memory_space<vmem>>, %arg3: memref<8x64xbf16, #tpu.memory_space<vmem>>, %arg4: memref<8x1xf32, #tpu.memory_space<vmem>>, %arg5: memref<8x1xf32, #tpu.memory_space<vmem>>, %arg6: memref<1x8x128xbf16, #tpu.memory_space<vmem>>) attributes {dimension_semantics = [#tpu.dimension_semantics<parallel>, #tpu.dimension_semantics<parallel>], iteration_bounds = array<i64: 2, 1>, scalar_prefetch = 0 : i64, scratch_operands = 0 : i64, tpu.core_type = #tpu.core_type<tc>, window_params = [{transform_indices = @transform_0, window_bounds = array<i64: 1, 16, 256>}, {transform_indices = @transform_1, window_bounds = array<i64: 8, 64>}, {transform_indices = @transform_2, window_bounds = array<i64: 8, 1>}, {transform_indices = @transform_3, window_bounds = array<i64: 8, 1>}, {transform_indices = @transform_4, window_bounds = array<i64: 1, 8, 128>}]} {
    %c0 = arith.constant 0 : index
    %c0_0 = arith.constant 0 : index
    %c0_1 = arith.constant 0 : index
    %0 = vector.load %arg2[%c0, %c0_0, %c0_1] : memref<1x16x256xbf16, #tpu.memory_space<vmem>>, vector<1x16x128xbf16>
    %1 = vector.shape_cast %0 : vector<1x16x128xbf16> to vector<16x128xbf16>
    %c0_2 = arith.constant 0 : index
    %c0_3 = arith.constant 0 : index
    %c1 = arith.constant 1 : index
    %2 = vector.load %arg2[%c0_2, %c0_3, %c1] : memref<1x16x256xbf16, #tpu.memory_space<vmem>>, vector<1x16x128xbf16>
    %3 = vector.shape_cast %2 : vector<1x16x128xbf16> to vector<16x128xbf16>
    %c0_4 = arith.constant 0 : index
    %c0_5 = arith.constant 0 : index
    %c9 = arith.constant 9 : index
    %4 = vector.load %arg2[%c0_4, %c0_5, %c9] : memref<1x16x256xbf16, #tpu.memory_space<vmem>>, vector<1x16x128xbf16>
    %5 = vector.shape_cast %4 : vector<1x16x128xbf16> to vector<16x128xbf16>
    %c0_6 = arith.constant 0 : index
    %c0_7 = arith.constant 0 : index
    %c10 = arith.constant 10 : index
    %6 = vector.load %arg2[%c0_6, %c0_7, %c10] : memref<1x16x256xbf16, #tpu.memory_space<vmem>>, vector<1x16x128xbf16>
    %7 = vector.shape_cast %6 : vector<1x16x128xbf16> to vector<16x128xbf16>
    %8 = tpu.concatenate %1, %3, %5, %7 in 0 : vector<16x128xbf16>, vector<16x128xbf16>, vector<16x128xbf16>, vector<16x128xbf16> -> vector<64x128xbf16>
    %c0_8 = arith.constant 0 : index
    %c0_9 = arith.constant 0 : index
    %9 = vector.load %arg3[%c0_8, %c0_9] : memref<8x64xbf16, #tpu.memory_space<vmem>>, vector<8x64xbf16>
    %cst = arith.constant dense<0.000000e+00> : vector<8x128xf32>
    %10 = tpu.matmul %9, %8, %cst {dimension_numbers = #tpu.dot_dimension_numbers<[1], [0], [0], [1], [0, 0, 1, 1], [], []>} : vector<8x64xbf16>, vector<64x128xbf16>, vector<8x128xf32> -> vector<8x128xf32>
    %11 = tpu.iota {dimensions = array<i32: 1>} : vector<1x128xi32>
    %c9_i32 = arith.constant 9 : i32
    %c0_i32 = arith.constant 0 : i32
    %12 = arith.cmpi eq, %c9_i32, %c0_i32 : i32
    %c1_i32 = arith.constant 1 : i32
    %13 = arith.select %12, %c1_i32, %c9_i32 : i32
    %14 = vector.broadcast %13 : i32 to vector<1x128xi32>
    %15 = arith.remsi %11, %14 : vector<1x128xi32>
    %c0_i32_10 = arith.constant 0 : i32
    %16 = vector.broadcast %c0_i32_10 : i32 to vector<1x128xi32>
    %17 = arith.cmpi ne, %15, %16 : vector<1x128xi32>
    %c0_i32_11 = arith.constant 0 : i32
    %18 = vector.broadcast %c0_i32_11 : i32 to vector<1x128xi32>
    %19 = arith.cmpi slt, %15, %18 : vector<1x128xi32>
    %c0_i32_12 = arith.constant 0 : i32
    %20 = arith.cmpi slt, %13, %c0_i32_12 : i32
    %21 = vector.broadcast %20 : i1 to vector<1x128xi1>
    %22 = vector.broadcast %21 : vector<1x128xi1> to vector<1x128xi1>
    %23 = arith.xori %19, %22 : vector<1x128xi1>
    %24 = arith.andi %23, %17 : vector<1x128xi1>
    %25 = vector.broadcast %13 : i32 to vector<1x128xi32>
    %26 = arith.addi %15, %25 : vector<1x128xi32>
    %27 = arith.select %24, %26, %15 : vector<1x128xi1>, vector<1x128xi32>
    %c8_i32 = arith.constant 8 : i32
    %28 = vector.broadcast %c8_i32 : i32 to vector<1x128xi32>
    %29 = arith.cmpi slt, %27, %28 : vector<1x128xi32>
    %c72_i32 = arith.constant 72 : i32
    %30 = vector.broadcast %c72_i32 : i32 to vector<1x128xi32>
    %31 = arith.cmpi slt, %11, %30 : vector<1x128xi32>
    %32 = arith.andi %29, %31 : vector<1x128xi1>
    %33 = arith.extui %32 : vector<1x128xi1> to vector<1x128xi32>
    %34 = arith.sitofp %33 : vector<1x128xi32> to vector<1x128xf32>
    %35 = vector.broadcast %34 : vector<1x128xf32> to vector<8x128xf32>
    %36 = arith.mulf %10, %35 : vector<8x128xf32>
    %cst_13 = arith.constant dense<0.000000e+00> : vector<8xf32>
    %37 = vector.multi_reduction <add>, %36, %cst_13 [1] : vector<8x128xf32> to vector<8xf32>
    %38 = vector.shape_cast %37 : vector<8xf32> to vector<8x1xf32>
    %cst_14 = arith.constant 1.562500e-02 : f32
    %39 = vector.broadcast %cst_14 : f32 to vector<8x1xf32>
    %40 = arith.mulf %38, %39 : vector<8x1xf32>
    %41 = arith.mulf %36, %10 : vector<8x128xf32>
    %cst_15 = arith.constant dense<0.000000e+00> : vector<8xf32>
    %42 = vector.multi_reduction <add>, %41, %cst_15 [1] : vector<8x128xf32> to vector<8xf32>
    %43 = vector.shape_cast %42 : vector<8xf32> to vector<8x1xf32>
    %cst_16 = arith.constant 1.562500e-02 : f32
    %44 = vector.broadcast %cst_16 : f32 to vector<8x1xf32>
    %45 = arith.mulf %43, %44 : vector<8x1xf32>
    %46 = arith.mulf %40, %40 : vector<8x1xf32>
    %47 = arith.subf %45, %46 : vector<8x1xf32>
    %cst_17 = arith.constant 0.000000e+00 : f32
    %48 = vector.broadcast %cst_17 : f32 to vector<8x1xf32>
    %49 = arith.maximumf %47, %48 : vector<8x1xf32>
    %c0_18 = arith.constant 0 : index
    %c0_19 = arith.constant 0 : index
    %50 = vector.load %arg4[%c0_18, %c0_19] : memref<8x1xf32, #tpu.memory_space<vmem>>, vector<8x1xf32>
    %cst_20 = arith.constant 9.99999974E-6 : f32
    %51 = vector.broadcast %cst_20 : f32 to vector<8x1xf32>
    %52 = arith.addf %49, %51 : vector<8x1xf32>
    %53 = math.rsqrt %52 : vector<8x1xf32>
    %54 = arith.mulf %50, %53 : vector<8x1xf32>
    %c0_21 = arith.constant 0 : index
    %c0_22 = arith.constant 0 : index
    %55 = vector.load %arg5[%c0_21, %c0_22] : memref<8x1xf32, #tpu.memory_space<vmem>>, vector<8x1xf32>
    %56 = arith.mulf %40, %54 : vector<8x1xf32>
    %57 = arith.subf %55, %56 : vector<8x1xf32>
    %58 = vector.broadcast %54 : vector<8x1xf32> to vector<8x128xf32>
    %59 = arith.mulf %10, %58 : vector<8x128xf32>
    %60 = vector.broadcast %57 : vector<8x1xf32> to vector<8x128xf32>
    %61 = arith.addf %59, %60 : vector<8x128xf32>
    %cst_23 = arith.constant 0.000000e+00 : f32
    %62 = vector.broadcast %cst_23 : f32 to vector<8x128xf32>
    %63 = arith.cmpf oge, %61, %62 : vector<8x128xf32>
    %cst_24 = arith.constant 2.000000e-01 : f32
    %64 = vector.broadcast %cst_24 : f32 to vector<8x128xf32>
    %65 = arith.mulf %64, %61 : vector<8x128xf32>
    %66 = arith.select %63, %61, %65 : vector<8x128xi1>, vector<8x128xf32>
    %67 = arith.truncf %66 : vector<8x128xf32> to vector<8x128xbf16>
    %c0_25 = arith.constant 0 : index
    %c0_26 = arith.constant 0 : index
    %c0_27 = arith.constant 0 : index
    %68 = vector.load %arg6[%c0_25, %c0_26, %c0_27] : memref<1x8x128xbf16, #tpu.memory_space<vmem>>, vector<1x8x128xbf16>
    %69 = vector.shape_cast %68 : vector<1x8x128xbf16> to vector<8x128xbf16>
    %70 = vector.shape_cast %67 : vector<8x128xbf16> to vector<1x8x128xbf16>
    tpu.vector_store %arg6[%c0_25, %c0_26, %c0_27], %70 {strides = array<i32>} : memref<1x8x128xbf16, #tpu.memory_space<vmem>>, vector<1x8x128xbf16>,
    return
  }
  func.func @transform_0(%arg0: i32, %arg1: i32) -> (i32, i32, i32) {
    %c0_i32 = arith.constant 0 : i32
    %c0_i32_0 = arith.constant 0 : i32
    %c0_i32_1 = arith.constant 0 : i32
    return %arg0, %c0_i32, %c0_i32_0 : i32, i32, i32
  }
  func.func @transform_1(%arg0: i32, %arg1: i32) -> (i32, i32) {
    %c0_i32 = arith.constant 0 : i32
    %c0_i32_0 = arith.constant 0 : i32
    return %arg1, %c0_i32 : i32, i32
  }
  func.func @transform_2(%arg0: i32, %arg1: i32) -> (i32, i32) {
    %c0_i32 = arith.constant 0 : i32
    %c0_i32_0 = arith.constant 0 : i32
    return %arg1, %c0_i32 : i32, i32
  }
  func.func @transform_3(%arg0: i32, %arg1: i32) -> (i32, i32) {
    %c0_i32 = arith.constant 0 : i32
    %c0_i32_0 = arith.constant 0 : i32
    return %arg1, %c0_i32 : i32, i32
  }
  func.func @transform_4(%arg0: i32, %arg1: i32) -> (i32, i32, i32) {
    %c0_i32 = arith.constant 0 : i32
    %c0_i32_0 = arith.constant 0 : i32
    return %arg0, %arg1, %c0_i32 : i32, i32, i32
  }
}

</mosaic_0001>

<llo_original>
// kernel: tpu_custom_call.1
$region0: #{tpu_custom_call.1}
  #allocation0 [shape = 'u32[]', space=smem, size = 0x4, offset = 0x4, fixed_abs, tag = 'smem constant byte address 0x4 - core index']
  #allocation1 [shape = 'u32[144,128]{1,0:T(1,128)}', space=vmem, size = 0x12000, scoped, tag = 'internal scratch']
  %s0 = inlined_call_operand.hbm [shape: bf16[2,16,256], index: 0, kind: input, shape index: {}]
  %s1 = inlined_call_operand.vmem [shape: bf16[8,64], index: 1, kind: input, shape index: {}]
  %s2 = inlined_call_operand.vmem [shape: f32[8,1], index: 2, kind: input, shape index: {}]
  %s3 = inlined_call_operand.vmem [shape: f32[8,1], index: 3, kind: input, shape index: {}]
  %s4 = inlined_call_operand.hbm [shape: bf16[2,8,128], index: 4, kind: output, shape index: {}]
  %s5 = sld [smem:[#allocation0]]
  $region53: #{tpu_custom_call.1} parent=0
    _
  %s7 = ssub.s32 1, %s5
  %s8 = scalar_select 0, %s7, %s5
  $region1: #{tpu_custom_call.1} parent=0
    #allocation2 [shape = 'u8[16384]{0}', space=vmem, size = 0x4000, scoped, tag = 'input window, operand 0']
    #allocation3 [shape = 's32[2]{0}', space=sflag, size = 0x8, scoped, tag = 'scoped memory for tpu_custom_call.1']
    #allocation4 [shape = 's32[2]{0}', space=sflag, size = 0x8, scoped, tag = 'scoped memory for tpu_custom_call.1']
    #allocation5 [shape = 'u8[4096]{0}', space=vmem, size = 0x1000, scoped, tag = 'output window, operand 0']
    %9 = vsyncpa [#allocation3], 0
    %s10 = scalar_lea.sflag [#allocation3], 1
    %11 = vsyncpa %s10, 0
    %12 = vsyncpa [#allocation4], 0
    %s13 = scalar_lea.sflag [#allocation4], 1
    %14 = vsyncpa %s13, 0
    loop: start=0, step=1, limit=4
    $region2: #{tpu_custom_call.1} parent=1 // loop_pre_header
      _
    $region3: #{tpu_custom_call.1} parent=1 // loop_header
      %s16 = sphi 0, %s20
      %p17 = scmp.ge.s32.totalorder %s16, 4
      %s23 = sphi 0, %s35
      %s24 = sphi 0, %s31
      %s25 = sphi 0, %s23
      %s26 = sphi 0, %s24
      %s27 = sphi 0, %s25
      %s28 = sphi 0, %s26
      %s38 = sphi 0, %s40
      %s41 = sphi 0, %s38
      %s42 = sphi 0, %s41
      %s58 = sphi 0, %s42
      %s64 = sphi 0, %s66
      %s67 = sphi 0, %s64
      %s68 = sphi 0, %s67
      %s84 = sphi 0, %s68
      %s90 = sphi 0, %s92
      %s93 = sphi 0, %s90
      %s94 = sphi 0, %s93
      %s110 = sphi 0, %s94
      %s116 = sphi 0, %s118
      %s119 = sphi 0, %s116
      %s120 = sphi 0, %s119
      %s136 = sphi 0, %s120
      %s144 = sphi 0, %s146
      %s147 = sphi 0, %s144
      %s148 = sphi 0, %s147
      %s164 = sphi 0, %s148
    $region4: #{tpu_custom_call.1} parent=1 // loop_header_branch
      %19 = sbr.rel (%p17) target = $region8
    $region5: #{tpu_custom_call.1} parent=1 // loop_body
      %s21 = ssub.s32 %s16, 1
      %s22 = ssub.s32 %s16, 2
      %s29 = sadd.s32 1, %s24
      %p30 = scmp.ge.s32.totalorder %s29, 1
      %s31 = scalar_select %p30, 0, %s29
      %s32 = sadd.s32 1, %s23
      %s33 = scalar_select %p30, %s32, %s23
      %p34 = scmp.ge.s32.totalorder %s33, 2
      %s35 = scalar_select %p34, 0, %s33
      %s36 = ssub.s32 %s23, %s35
      %p37 = scmp.eq.s32.totalorder %s36, 0
      %s39 = sadd.s32 %s38, 1
      %s40 = scalar_select %p37, %s38, %s39
      %p43 = pneg %p37
      %p44 = scmp.eq.s32.totalorder %s16, 1
      %p45 = por %p43, %p44
      %p46 = scmp.ne.s32.totalorder %s38, %s41
      %p47 = scmp.eq.s32.totalorder %s16, 0
      %p48 = por %p46, %p47
      %p49 = scmp.ne.s32.totalorder %s38, %s41
      %p50 = scmp.eq.s32.totalorder %s21, 1
      %p51 = por %p49, %p50
      %p52 = scmp.ne.s32.totalorder %s41, %s42
      %p53 = scmp.eq.s32.totalorder %s21, 0
      %p54 = por %p52, %p53
      %p55 = scmp.ne.s32.totalorder %s41, %s42
      %p56 = scmp.eq.s32.totalorder %s22, 1
      %p57 = por %p55, %p56
      %p59 = scmp.ne.s32.totalorder %s42, %s58
      %p60 = scmp.eq.s32.totalorder %s22, 0
      %p61 = por %p59, %p60
      %s62 = ssub.s32 %s24, %s31
      %p63 = scmp.eq.s32.totalorder %s62, 0
      %s65 = sadd.s32 %s64, 1
      %s66 = scalar_select %p63, %s64, %s65
      %p69 = pneg %p63
      %p70 = scmp.eq.s32.totalorder %s16, 1
      %p71 = por %p69, %p70
      %p72 = scmp.ne.s32.totalorder %s64, %s67
      %p73 = scmp.eq.s32.totalorder %s16, 0
      %p74 = por %p72, %p73
      %p75 = scmp.ne.s32.totalorder %s64, %s67
      %p76 = scmp.eq.s32.totalorder %s21, 1
      %p77 = por %p75, %p76
      %p78 = scmp.ne.s32.totalorder %s67, %s68
      %p79 = scmp.eq.s32.totalorder %s21, 0
      %p80 = por %p78, %p79
      %p81 = scmp.ne.s32.totalorder %s67, %s68
      %p82 = scmp.eq.s32.totalorder %s22, 1
      %p83 = por %p81, %p82
      %p85 = scmp.ne.s32.totalorder %s68, %s84
      %p86 = scmp.eq.s32.totalorder %s22, 0
      %p87 = por %p85, %p86
      %s88 = ssub.s32 %s24, %s31
      %p89 = scmp.eq.s32.totalorder %s88, 0
      %s91 = sadd.s32 %s90, 1
      %s92 = scalar_select %p89, %s90, %s91
      %p95 = pneg %p89
      %p96 = scmp.eq.s32.totalorder %s16, 1
      %p97 = por %p95, %p96
      %p98 = scmp.ne.s32.totalorder %s90, %s93
      %p99 = scmp.eq.s32.totalorder %s16, 0
      %p100 = por %p98, %p99
      %p101 = scmp.ne.s32.totalorder %s90, %s93
      %p102 = scmp.eq.s32.totalorder %s21, 1
      %p103 = por %p101, %p102
      %p104 = scmp.ne.s32.totalorder %s93, %s94
      %p105 = scmp.eq.s32.totalorder %s21, 0
      %p106 = por %p104, %p105
      %p107 = scmp.ne.s32.totalorder %s93, %s94
      %p108 = scmp.eq.s32.totalorder %s22, 1
      %p109 = por %p107, %p108
      %p111 = scmp.ne.s32.totalorder %s94, %s110
      %p112 = scmp.eq.s32.totalorder %s22, 0
      %p113 = por %p111, %p112
      %s114 = ssub.s32 %s24, %s31
      %p115 = scmp.eq.s32.totalorder %s114, 0
      %s117 = sadd.s32 %s116, 1
      %s118 = scalar_select %p115, %s116, %s117
      %p121 = pneg %p115
      %p122 = scmp.eq.s32.totalorder %s16, 1
      %p123 = por %p121, %p122
      %p124 = scmp.ne.s32.totalorder %s116, %s119
      %p125 = scmp.eq.s32.totalorder %s16, 0
      %p126 = por %p124, %p125
      %p127 = scmp.ne.s32.totalorder %s116, %s119
      %p128 = scmp.eq.s32.totalorder %s21, 1
      %p129 = por %p127, %p128
      %p130 = scmp.ne.s32.totalorder %s119, %s120
      %p131 = scmp.eq.s32.totalorder %s21, 0
      %p132 = por %p130, %p131
      %p133 = scmp.ne.s32.totalorder %s119, %s120
      %p134 = scmp.eq.s32.totalorder %s22, 1
      %p135 = por %p133, %p134
      %p137 = scmp.ne.s32.totalorder %s120, %s136
      %p138 = scmp.eq.s32.totalorder %s22, 0
      %p139 = por %p137, %p138
      %s140 = ssub.s32 %s23, %s35
      %s141 = ssub.s32 %s24, %s31
      %s142 = sor.u32 %s140, %s141
      %p143 = scmp.eq.s32.totalorder %s142, 0
      %s145 = sadd.s32 %s144, 1
      %s146 = scalar_select %p143, %s144, %s145
      %p149 = pneg %p143
      %p150 = scmp.eq.s32.totalorder %s16, 1
      %p151 = por %p149, %p150
      %p152 = scmp.ne.s32.totalorder %s144, %s147
      %p153 = scmp.eq.s32.totalorder %s16, 0
      %p154 = por %p152, %p153
      %p155 = scmp.ne.s32.totalorder %s144, %s147
      %p156 = scmp.eq.s32.totalorder %s21, 1
      %p157 = por %p155, %p156
      %p158 = scmp.ne.s32.totalorder %s147, %s148
      %p159 = scmp.eq.s32.totalorder %s21, 0
      %p160 = por %p158, %p159
      %p161 = scmp.ne.s32.totalorder %s147, %s148
      %p162 = scmp.eq.s32.totalorder %s22, 1
      %p163 = por %p161, %p162
      %p165 = scmp.ne.s32.totalorder %s148, %s164
      %p166 = scmp.eq.s32.totalorder %s22, 0
      %p167 = por %p165, %p166
      %p168 = scmp.le.s32.totalorder 1, %s16
      %p169 = scmp.lt.s32.totalorder %s16, 3
      %p170 = pnand %p168, %p169
      %p171 = pneg %p170
      // Predicated region
      $region9: #{tpu_custom_call.1} parent=5 // pred_check
        _
      $region10: #{tpu_custom_call.1} parent=5 // pred_check_branch
        %173 = sbr.rel (%p170) target = $region12
      $region11: #{tpu_custom_call.1} parent=5 // pred_region
        %s174 = ssub.s32 %s16, 1
        // Predicated region
        $region13: #{tpu_custom_call.1} parent=11 // pred_check
          %p175 = pneg %p80
        $region14: #{tpu_custom_call.1} parent=11 // pred_check_branch
          %177 = sbr.rel (%p175) target = $region16
        $region15: #{tpu_custom_call.1} parent=11 // pred_region
          %p178 = scmp.lt.s32.totalorder %s26, 0
          %s179 = scalar_select %p178, %s26, 0
          %s180 = smul.addr %s179, 4
          %s181 = scalar_lea.vmem %s1, %s180
        $region16: #{tpu_custom_call.1} parent=11 // pred_fallthru
          _
        // Predicated region
        $region17: #{tpu_custom_call.1} parent=11 // pred_check
          %p182 = pneg %p106
        $region18: #{tpu_custom_call.1} parent=11 // pred_check_branch
          %184 = sbr.rel (%p182) target = $region20
        $region19: #{tpu_custom_call.1} parent=11 // pred_region
          %p185 = scmp.lt.s32.totalorder %s26, 0
          %s186 = scalar_select %p185, %s26, 0
          %s187 = smul.addr %s186, 8
          %s188 = scalar_lea.vmem %s2, %s187
        $region20: #{tpu_custom_call.1} parent=11 // pred_fallthru
          _
        // Predicated region
        $region21: #{tpu_custom_call.1} parent=11 // pred_check
          %p189 = pneg %p132
        $region22: #{tpu_custom_call.1} parent=11 // pred_check_branch
          %191 = sbr.rel (%p189) target = $region24
        $region23: #{tpu_custom_call.1} parent=11 // pred_region
          %p192 = scmp.lt.s32.totalorder %s26, 0
          %s193 = scalar_select %p192, %s26, 0
          %s194 = smul.addr %s193, 8
          %s195 = scalar_lea.vmem %s3, %s194
        $region24: #{tpu_custom_call.1} parent=11 // pred_fallthru
          _
      $region12: #{tpu_custom_call.1} parent=5 // pred_fallthru
        _
      %p196 = scmp.lt.s32.totalorder %s16, 2
      // Predicated region
      $region25: #{tpu_custom_call.1} parent=5 // pred_check
        %p197 = pneg %p196
      $region26: #{tpu_custom_call.1} parent=5 // pred_check_branch
        %199 = sbr.rel (%p197) target = $region28
      $region27: #{tpu_custom_call.1} parent=5 // pred_region
        // Predicated region
        $region29: #{tpu_custom_call.1} parent=27 // pred_check
          %p200 = pneg %p48
        $region30: #{tpu_custom_call.1} parent=27 // pred_check_branch
          %202 = sbr.rel (%p200) target = $region32
        $region31: #{tpu_custom_call.1} parent=27 // pred_region
          %s203 = sand.u32 %s38, 1
          %s204 = scalar_lea.sflag [#allocation3], %s203
          %s205 = sand.u32 %s38, 1
          %s206 = smul.addr %s205, 16
          %s207 = scalar_lea.vmem [#allocation2], %s206
          %s209 = ssub.s32 256, 256
          %210 = vsyncadd %s204, %s209
          %s211 = smul.addr %s23, 4
          %s212 = smul.addr %s211, 64
          %s213 = scalar_lea.hbm %s0, %s212
          %s214 = sshll.u32 %s207, 4
          %s215 = int_to_ptr.vmem [resolvable:$true] %s214
          %220 = dma.hbm_to_vmem [thread:$0]  %s213, 256, %s215, %s204, 128, 128, 8
        $region32: #{tpu_custom_call.1} parent=27 // pred_fallthru
          _
      $region28: #{tpu_custom_call.1} parent=5 // pred_fallthru
        _
      %p221 = scmp.le.s32.totalorder 1, %s16
      %p222 = scmp.lt.s32.totalorder %s16, 3
      %p223 = pnand %p221, %p222
      %p224 = pneg %p223
      // Predicated region
      $region33: #{tpu_custom_call.1} parent=5 // pred_check
        _
      $region34: #{tpu_custom_call.1} parent=5 // pred_check_branch
        %226 = sbr.rel (%p223) target = $region36
      $region35: #{tpu_custom_call.1} parent=5 // pred_region
        %s227 = ssub.s32 %s16, 1
        %s228 = sand.u32 %s41, 1
        %s229 = scalar_lea.sflag [#allocation3], %s228
        %s230 = sand.u32 %s41, 1
        %s231 = smul.addr %s230, 16
        %s232 = scalar_lea.vmem [#allocation2], %s231
        // Predicated region
        $region37: #{tpu_custom_call.1} parent=35 // pred_check
          %p233 = pneg %p54
        $region38: #{tpu_custom_call.1} parent=35 // pred_check_branch
          %235 = sbr.rel (%p233) target = $region40
        $region39: #{tpu_custom_call.1} parent=35 // pred_region
          %236 = dma.done %s229, 256
        $region40: #{tpu_custom_call.1} parent=35 // pred_fallthru
          _
        %s237 = sand.u32 %s41, 1
        %s238 = scalar_lea.sflag [#allocation3], %s237
        %s239 = sand.u32 %s41, 1
        %s240 = smul.addr %s239, 16
        %s241 = scalar_lea.vmem [#allocation2], %s240
        %p242 = pneg %p54
        %p243 = pneg %p51
        %p244 = scmp.lt.s32.totalorder %s26, 0
        %s245 = scalar_select %p244, %s26, 0
        %s246 = smul.addr %s245, 4
        %s247 = scalar_lea.vmem %s1, %s246
        %p248 = pneg %p80
        %p249 = pneg %p77
        %p250 = scmp.lt.s32.totalorder %s26, 0
        %s251 = scalar_select %p250, %s26, 0
        %s252 = smul.addr %s251, 8
        %s253 = scalar_lea.vmem %s2, %s252
        %p254 = pneg %p106
        %p255 = pneg %p103
        %p256 = scmp.lt.s32.totalorder %s26, 0
        %s257 = scalar_select %p256, %s26, 0
        %s258 = smul.addr %s257, 8
        %s259 = scalar_lea.vmem %s3, %s258
        %p260 = pneg %p132
        %p261 = pneg %p129
        %p262 = pneg %p160
        %p263 = pneg %p157
        %s264 = sand.u32 %s147, 1
        %s265 = scalar_lea.sflag [#allocation4], %s264
        %s266 = sand.u32 %s147, 1
        %s267 = smul.addr %s266, 4
        %s268 = scalar_lea.vmem [#allocation5], %s267
        %p269 = scmp.lt.s32.totalorder %s26, 0
        %s270 = scalar_select %p269, %s26, 0
        %s271 = smul.addr %s270, 4
        %s272 = scalar_lea.vmem %s1, %s271
        %p273 = scmp.lt.s32.totalorder %s26, 0
        %s274 = scalar_select %p273, %s26, 0
        %s275 = smul.addr %s274, 8
        %s276 = scalar_lea.vmem %s2, %s275
        %p277 = scmp.lt.s32.totalorder %s26, 0
        %s278 = scalar_select %p277, %s26, 0
        %s279 = smul.addr %s278, 8
        %s280 = scalar_lea.vmem %s3, %s279
        %v282 = vld [vmem:[%s232] sm:$0xf]
        %v283 = vld [vmem:[%s232 + $0x8] sm:$0xf]
        %v284 = vld [vmem:[%s232] sm:$0xff]
        %v285 = vld [vmem:[%s232 + $0x8] sm:$0xff]
        %v288 = vunpack.c.l.b16 %v282
        %v289 = vunpack.c.l.b16 %v283
        %v290 = vpack.c.b16 %v289, %v288
        %v294 = vunpack.c.l.b16 %v284
        %v295 = vunpack.c.h.b16 %v284
        %v296 = vunpack.c.l.b16 %v285
        %v297 = vunpack.c.h.b16 %v285
        %v298 = vpack.c.b16 %v296, %v294
        %v299 = vpack.c.b16 %v297, %v295
        %300 = vrot.lane.b32.xlu0 %v298, 127
        %v301 = vpop.permute.xlu0 %300
        %302 = vrot.lane.b32.xlu0 %v299, 127
        %v303 = vpop.permute.xlu0 %302
        %vm304 = vcmask 1039360
        %v305 = vsel %vm304, %v301, %v303
        %307 = vrot.lane.b32.xlu0 %v298, 119
        %v308 = vpop.permute.xlu0 %307
        %309 = vrot.lane.b32.xlu0 %v299, 119
        %v310 = vpop.permute.xlu0 %309
        %vm311 = vcmask 973824
        %v312 = vsel %vm311, %v308, %v310
        %314 = vrot.lane.b32.xlu0 %v298, 118
        %v315 = vpop.permute.xlu0 %314
        %316 = vrot.lane.b32.xlu0 %v299, 118
        %v317 = vpop.permute.xlu0 %316
        %vm318 = vcmask 965632
        %v319 = vsel %vm318, %v315, %v317
        %v321 = vld [vmem:[%s272] sm:$0xf]
        %vm322 = vcmask 523264
        %v324 = vsel %vm322, %v321, 0
        %326 = vmatprep.subr.bf16.mxu0 0
        %327 = vmatpush1.bf16.msra.mxu0 0
        %328 = vmatprep.subr.bf16.mxu0 0
        %329 = vmatpush1.bf16.msra.mxu0 0
        %330 = vmatprep.subr.bf16.mxu0 0
        %331 = vmatpush1.bf16.msra.mxu0 0
        %332 = vmatprep.subr.bf16.mxu0 0
        %333 = vmatpush1.bf16.msra.mxu0 0
        %334 = vmatprep.subr.bf16.mxu0 0
        %335 = vmatpush1.bf16.msra.mxu0 %v319
        %336 = vmatprep.subr.bf16.mxu0 0
        %337 = vmatpush1.bf16.msra.mxu0 %v312
        %338 = vmatprep.subr.bf16.mxu0 0
        %339 = vmatpush1.bf16.msra.mxu0 %v305
        %340 = vmatprep.subr.bf16.mxu0 0
        %341 = vmatpush1.bf16.msra.mxu0 %v290
        %342 = vmatprep.subr.bf16.mxu0 0
        %343 = vmatpush2.bf16.msra.mxu0 0
        %344 = vmatprep.subr.bf16.mxu0 0
        %345 = vmatpush2.bf16.msra.mxu0 0
        %346 = vmatprep.subr.bf16.mxu0 0
        %347 = vmatpush2.bf16.msra.mxu0 0
        %348 = vmatprep.subr.bf16.mxu0 0
        %349 = vmatpush2.bf16.msra.mxu0 0
        %350 = vmatprep.subr.bf16.mxu0 0
        %351 = vmatpush2.bf16.msra.mxu0 0
        %352 = vmatprep.subr.bf16.mxu0 0
        %353 = vmatpush2.bf16.msra.mxu0 0
        %354 = vmatprep.subr.bf16.mxu0 0
        %355 = vmatpush2.bf16.msra.mxu0 0
        %356 = vmatprep.subr.bf16.mxu0 0
        %357 = vmatpush2.bf16.msra.mxu0 0
        %358 = vmatprep.mubr.bf16.mxu0 0
        %359 = vmatmul.mubr.bf16.gmra.mxu0 %v324
        %v360 = vpop.f32.mrf.mxu0
        %v361 = vadd.f32 0.0, %v360
        %v362 = vpop.f32.mrf.mxu0
        %v363 = vpop.f32.mrf.mxu0
        %v364 = vpop.f32.mrf.mxu0
        %365 = vdwg.mxu0
        %v366 = vlaneseq
        %v367 = vand.u32 %v366, 127
        %vm368 = vcmp.lt.s32.totalorder %v367, 0
        %v369 = vsub.s32 0, %v367
        %v370 = vsel %vm368, %v369, %v367
        %v371 = vmul.u32.u64.compose %v370, 3817748708
        %v372 = vextract.low.u32 %v371
        %v373 = vextract.high.u32 %v371
        %v374 = vshrl.u32 %v373, 3
        %v375 = vmul.u32 %v374, 9
        %v376 = vsub.s32 %v370, %v375
        %v377 = vsub.s32 0, %v376
        %v378 = vsel %vm368, %v377, %v376
        %vm379 = vcmp.ne.s32.totalorder %v378, 0
        %vm380 = vcmp.lt.s32.totalorder %v378, 0
        %vm381 = vmand %vm380, %vm379
        %v382 = vadd.s32 %v378, 9
        %v383 = vsel %vm381, %v382, %v378
        %vm384 = vcmp.lt.s32.totalorder %v383, 8
        %vm385 = vcmp.lt.s32.totalorder %v367, 72
        %vm386 = vmand %vm384, %vm385
        %v387 = vsel %vm386, 1, 0
        %v388 = vcvt.s32.f32 %v387
        %v389 = vmul.f32 %v361, %v388
        %390 = vadd.xlane.f32.xlu0 %v389
        %v391 = vpop.xlane.xlu0 %390
        %v392 = vmul.f32 %v391, 0.015625
        %v393 = vmul.f32 %v389, %v361
        %394 = vadd.xlane.f32.xlu0 %v393
        %v395 = vpop.xlane.xlu0 %394
        %v396 = vmul.f32 %v395, 0.015625
        %v397 = vmul.f32 %v392, %v392
        %v398 = vsub.f32 %v396, %v397
        %v399 = vmax.f32 %v398, 0.0
        %v400 = vld [vmem:[%s276] sm:$0xff]
        %v401 = vadd.f32 %v399, 1e-05
        %v402 = vrsqrt.pop %v401
        %v403 = vmul.f32 %v400, %v402
        %v404 = vld [vmem:[%s280] sm:$0xff]
        %v405 = vmul.f32 %v392, %v403
        %v406 = vsub.f32 %v404, %v405
        %408 = vset.pattern.permute.xlu0 0
        %409 = vperm.xlu0 %408, %v403
        %v410 = vpop.permute.xlu0 %409
        %v412 = vmul.f32 %v361, %v410
        %414 = vset.pattern.permute.xlu0 0
        %415 = vperm.xlu0 %414, %v406
        %v416 = vpop.permute.xlu0 %415
        %v418 = vadd.f32 %v412, %v416
        %vm419 = vcmp.ge.f32.partialorder %v418, 0.0
        %v420 = vmul.f32 %v418, 0.2
        %v421 = vsel %vm419, %v418, %v420
        %v422 = vpack.c.bf16 %v421, %v421
        %423 = vst [vmem:[%s268] sm:$0xf] %v422
        %s424 = sand.u32 %s147, 1
        %s425 = scalar_lea.sflag [#allocation4], %s424
        %s426 = sand.u32 %s147, 1
        %s427 = smul.addr %s426, 4
        %s428 = scalar_lea.vmem [#allocation5], %s427
        // Predicated region
        $region41: #{tpu_custom_call.1} parent=35 // pred_check
          %p429 = pneg %p157
        $region42: #{tpu_custom_call.1} parent=35 // pred_check_branch
          %431 = sbr.rel (%p429) target = $region44
        $region43: #{tpu_custom_call.1} parent=35 // pred_region
          %s433 = ssub.s32 64, 64
          %434 = vsyncadd %s425, %s433
          %s435 = sadd.s32 %s26, %s25
          %s436 = smul.addr %s435, 64
          %s437 = scalar_lea.hbm %s4, %s436
          %s439 = sshll.u32 %s428, 4
          %s440 = int_to_ptr.vmem [resolvable:$true] %s439
          %442 = dma.vmem_to_hbm [thread:$0]  %s440, 64, %s437, %s425
        $region44: #{tpu_custom_call.1} parent=35 // pred_fallthru
          _
      $region36: #{tpu_custom_call.1} parent=5 // pred_fallthru
        _
      %p443 = scmp.le.s32.totalorder 2, %s16
      // Predicated region
      $region45: #{tpu_custom_call.1} parent=5 // pred_check
        %p444 = pneg %p443
      $region46: #{tpu_custom_call.1} parent=5 // pred_check_branch
        %446 = sbr.rel (%p444) target = $region48
      $region47: #{tpu_custom_call.1} parent=5 // pred_region
        %s447 = ssub.s32 %s16, 2
        // Predicated region
        $region49: #{tpu_custom_call.1} parent=47 // pred_check
          %p448 = pneg %p163
        $region50: #{tpu_custom_call.1} parent=47 // pred_check_branch
          %450 = sbr.rel (%p448) target = $region52
        $region51: #{tpu_custom_call.1} parent=47 // pred_region
          %s451 = sand.u32 %s148, 1
          %s452 = scalar_lea.sflag [#allocation4], %s451
          %s453 = sand.u32 %s148, 1
          %s454 = smul.addr %s453, 4
          %s455 = scalar_lea.vmem [#allocation5], %s454
          %456 = dma.done %s452, 64
        $region52: #{tpu_custom_call.1} parent=47 // pred_fallthru
          _
      $region48: #{tpu_custom_call.1} parent=5 // pred_fallthru
        _
    $region6: #{tpu_custom_call.1} parent=1 // loop_footer
      %s20 = sadd.s32 1, %s16
    $region7: #{tpu_custom_call.1} parent=1 // loop_footer_branch
      %15 = sbr.rel target = $region3
    $region8: #{tpu_custom_call.1} parent=1 // loop_exit
      _
    %457 = vsyncpa [#allocation3], 1
    %s458 = scalar_lea.sflag [#allocation3], 1
    %459 = vsyncpa %s458, 1
    %460 = vsyncpa [#allocation4], 1
    %s461 = scalar_lea.sflag [#allocation4], 1
    %462 = vsyncpa %s461, 1

</llo_original>
